<compile_context>
chip_gen: v5e
topology: v5e:2x2
jax: 0.10.0
libtpu: 0.0.40
codegen_flags: <defaults>
</compile_context>

<pallas_src>
import functools
import math

import jax
import jax.numpy as jnp
from jax.experimental import pallas as pl
from jax.experimental.pallas import tpu as pltpu


def _lora_kernel(x_ref, a_ref, b_ref, o_ref, *, scaling):
    # x tile (TM, in) @ A (in, rank) -> (TM, rank) on the MXU, f32 accumulate.
    t = jnp.dot(x_ref[...], a_ref[...], preferred_element_type=jnp.float32)
    # Scale the tiny intermediate (TM * rank elements) instead of the output.
    t = t * scaling
    # (TM, rank) @ B (rank, out) -> (TM, out), f32 accumulate.
    y = jnp.dot(t, b_ref[...], preferred_element_type=jnp.float32)
    o_ref[...] = y.astype(o_ref.dtype)


def _pick_block_rows(batch, in_features, out_features, itemsize,
                     vmem_budget_bytes=24 << 20):
    """Largest row tile whose double-buffered x+y tiles fit the VMEM budget."""
    per_row = (in_features + out_features) * itemsize * 2  # x+y, double-buffered
    tm = max(8, vmem_budget_bytes // max(per_row, 1))
    tm = min(int(tm), 1024, batch)
    if tm < batch:
        tm = max(8, (tm // 8) * 8)  # keep sublane-aligned unless full batch
    return int(tm)


def lora_forward(x, lora_a, lora_b, *, alpha=32, block_rows=None):
    """y = (x @ lora_a @ lora_b) * (alpha / rank), tiled over batch rows."""
    batch, in_features = x.shape
    rank = lora_a.shape[1]
    out_features = lora_b.shape[1]
    scaling = alpha / rank

    itemsize = jnp.dtype(x.dtype).itemsize
    if block_rows is None:
        tm = _pick_block_rows(batch, in_features, out_features, itemsize)
    else:
        tm = min(int(block_rows), batch)
    grid = (pl.cdiv(batch, tm),)

    # VMEM needed: double-buffered x & y tiles + resident A, B (+ slack).
    tile_bytes = 2 * tm * (in_features + out_features) * itemsize
    resident_bytes = (in_features * rank * jnp.dtype(lora_a.dtype).itemsize
                      + rank * out_features * jnp.dtype(lora_b.dtype).itemsize)
    vmem_limit = min(int(tile_bytes + resident_bytes + (2 << 20)), 48 << 20)

    cost = pl.CostEstimate(
        flops=2 * batch * rank * (in_features + out_features),
        transcendentals=0,
        bytes_accessed=(batch * in_features * itemsize
                        + batch * out_features * itemsize
                        + resident_bytes),
    )

    kernel = functools.partial(_lora_kernel, scaling=scaling)

    return pl.pallas_call(
        kernel,
        out_shape=jax.ShapeDtypeStruct((batch, out_features), x.dtype),
        grid=grid,
        in_specs=[
            # Streamed x tile: one block of rows per grid step.
            pl.BlockSpec((tm, in_features), lambda i: (i, 0)),
            # Resident adapters: same (only) block for every grid step.
            pl.BlockSpec((in_features, rank), lambda i: (0, 0)),
            pl.BlockSpec((rank, out_features), lambda i: (0, 0)),
        ],
        out_specs=pl.BlockSpec((tm, out_features), lambda i: (i, 0)),
        compiler_params=pltpu.CompilerParams(
            dimension_semantics=("parallel",),
            vmem_limit_bytes=vmem_limit,
        ),
        cost_estimate=cost,
    )(x, lora_a, lora_b)


def init_lora_params(key, in_features, out_features, rank=4):
    """Deterministic init matching LoRALayer.reset_parameters()."""
    # nn.init.kaiming_uniform_(lora_A, a=sqrt(5)) on a (in_features, rank) tensor:
    # fan_in = rank (PyTorch uses size(1)); gain = sqrt(2/(1+a^2)); bound = gain*sqrt(3/fan_in)
    a = math.sqrt(5.0)
    gain = math.sqrt(2.0 / (1.0 + a * a))
    bound = gain * math.sqrt(3.0 / rank)
    lora_a = jax.random.uniform(
        key, (in_features, rank), minval=-bound, maxval=bound, dtype=jnp.float32
    )
    lora_b = jnp.zeros((rank, out_features), dtype=jnp.float32)
    return lora_a, lora_b


if __name__ == "__main__":
    key = jax.random.PRNGKey(0)
    k_x, k_a, k_b = jax.random.split(key, 3)

    # Small shapes consistent with the module; batch chosen so the tiled path
    # (multiple grid steps) is actually exercised via block_rows=16.
    batch, in_features, out_features, rank, alpha = 64, 32, 32, 4, 32

    x = jax.random.normal(k_x, (batch, in_features), dtype=jnp.float32)
    lora_a, lora_b = init_lora_params(k_a, in_features, out_features, rank=rank)

    # 1) As-initialized module: lora_B == 0 so output is exactly zero.
    y = jax.block_until_ready(lora_forward(x, lora_a, lora_b, alpha=alpha))
    ref = (x @ lora_a @ lora_b) * (alpha / rank)
    assert jnp.allclose(y, ref, atol=1e-5), "mismatch vs reference (zero B)"

    # 2) Nonzero B to exercise the full compute path, with multi-block grid.
    lora_b_nz = jax.random.normal(k_b, (rank, out_features), dtype=jnp.float32) * 0.02
    y_nz = jax.block_until_ready(
        lora_forward(x, lora_a, lora_b_nz, alpha=alpha, block_rows=16)
    )
    ref_nz = (x @ lora_a @ lora_b_nz) * (alpha / rank)
    assert jnp.allclose(y_nz, ref_nz, atol=1e-4), "mismatch vs reference (nonzero B)"

    # 3) Default (adaptive) tiling on the same data.
    y_auto = jax.block_until_ready(lora_forward(x, lora_a, lora_b_nz, alpha=alpha))
    assert jnp.allclose(y_auto, ref_nz, atol=1e-4), "mismatch vs reference (auto TM)"

    print("KERNEL_OK")
</pallas_src>

<mosaic_0001>
module attributes {stable_mosaic.version = 11 : i64} {
  func.func @_lora_kernel(%arg0: i32, %arg1: memref<64x32xf32, #tpu.memory_space<vmem>>, %arg2: memref<32x4xf32, #tpu.memory_space<vmem>>, %arg3: memref<4x32xf32, #tpu.memory_space<vmem>>, %arg4: memref<64x32xf32, #tpu.memory_space<vmem>>) attributes {dimension_semantics = [#tpu.dimension_semantics<parallel>], iteration_bounds = array<i64: 1>, scalar_prefetch = 0 : i64, scratch_operands = 0 : i64, tpu.core_type = #tpu.core_type<tc>, window_params = [{transform_indices = @transform_0, window_bounds = array<i64: 64, 32>}, {pipeline_mode = #tpu.pipeline_mode<synchronous>, transform_indices = @transform_1, window_bounds = array<i64: 32, 4>}, {pipeline_mode = #tpu.pipeline_mode<synchronous>, transform_indices = @transform_2, window_bounds = array<i64: 4, 32>}, {transform_indices = @transform_3, window_bounds = array<i64: 64, 32>}]} {
    %c0 = arith.constant 0 : index
    %c0_0 = arith.constant 0 : index
    %0 = vector.load %arg1[%c0, %c0_0] : memref<64x32xf32, #tpu.memory_space<vmem>>, vector<64x32xf32>
    %c0_1 = arith.constant 0 : index
    %c0_2 = arith.constant 0 : index
    %1 = vector.load %arg2[%c0_1, %c0_2] : memref<32x4xf32, #tpu.memory_space<vmem>>, vector<32x4xf32>
    %cst = arith.constant dense<0.000000e+00> : vector<64x4xf32>
    %2 = tpu.matmul %0, %1, %cst {dimension_numbers = #tpu.dot_dimension_numbers<[1], [0], [0], [1], [0, 0, 1, 1], [], []>} : vector<64x32xf32>, vector<32x4xf32>, vector<64x4xf32> -> vector<64x4xf32>
    %cst_3 = arith.constant 8.000000e+00 : f32
    %3 = vector.broadcast %cst_3 : f32 to vector<64x4xf32>
    %4 = arith.mulf %2, %3 : vector<64x4xf32>
    %c0_4 = arith.constant 0 : index
    %c0_5 = arith.constant 0 : index
    %5 = vector.load %arg3[%c0_4, %c0_5] : memref<4x32xf32, #tpu.memory_space<vmem>>, vector<4x32xf32>
    %cst_6 = arith.constant dense<0.000000e+00> : vector<64x32xf32>
    %6 = tpu.matmul %4, %5, %cst_6 {dimension_numbers = #tpu.dot_dimension_numbers<[1], [0], [0], [1], [0, 0, 1, 1], [], []>} : vector<64x4xf32>, vector<4x32xf32>, vector<64x32xf32> -> vector<64x32xf32>
    %c0_7 = arith.constant 0 : index
    %c0_8 = arith.constant 0 : index
    %7 = vector.load %arg4[%c0_7, %c0_8] : memref<64x32xf32, #tpu.memory_space<vmem>>, vector<64x32xf32>
    tpu.vector_store %arg4[%c0_7, %c0_8], %6 {strides = array<i32>} : memref<64x32xf32, #tpu.memory_space<vmem>>, vector<64x32xf32>,
    return
  }
  func.func @transform_0(%arg0: i32) -> (i32, i32) {
    %c0_i32 = arith.constant 0 : i32
    %c0_i32_0 = arith.constant 0 : i32
    return %arg0, %c0_i32 : i32, i32
  }
  func.func @transform_1(%arg0: i32) -> (i32, i32) {
    %c0_i32 = arith.constant 0 : i32
    %c0_i32_0 = arith.constant 0 : i32
    %c0_i32_1 = arith.constant 0 : i32
    return %c0_i32, %c0_i32_0 : i32, i32
  }
  func.func @transform_2(%arg0: i32) -> (i32, i32) {
    %c0_i32 = arith.constant 0 : i32
    %c0_i32_0 = arith.constant 0 : i32
    %c0_i32_1 = arith.constant 0 : i32
    return %c0_i32, %c0_i32_0 : i32, i32
  }
  func.func @transform_3(%arg0: i32) -> (i32, i32) {
    %c0_i32 = arith.constant 0 : i32
    %c0_i32_0 = arith.constant 0 : i32
    return %arg0, %c0_i32 : i32, i32
  }
}

</mosaic_0001>

<llo_original>
// kernel: tpu_custom_call.1
$region0: #{tpu_custom_call.1}
  #allocation0 [shape = 'u32[]', space=smem, size = 0x4, offset = 0x4, fixed_abs, tag = 'smem constant byte address 0x4 - core index']
  #allocation1 [shape = 'u32[72,128]{1,0:T(1,128)}', space=vmem, size = 0x9000, scoped, tag = 'internal scratch']
  %s0 = inlined_call_operand.vmem [shape: f32[64,32], index: 0, kind: input, shape index: {}]
  %s1 = inlined_call_operand.vmem [shape: f32[32,4], index: 1, kind: input, shape index: {}]
  %s2 = inlined_call_operand.vmem [shape: f32[4,32], index: 2, kind: input, shape index: {}]
  %s3 = inlined_call_operand.vmem [shape: f32[64,32], index: 3, kind: output, shape index: {}]
  %s4 = sld [smem:[#allocation0]]
  $region22: #{tpu_custom_call.1} parent=0
    _
  %s6 = ssub.s32 1, %s4
  %s7 = scalar_select 0, %s6, %s4
  // Predicated region
  $region2: #{tpu_custom_call.1} parent=0 // pred_check
    _
  $region3: #{tpu_custom_call.1} parent=0 // pred_check_branch
    %9 = sbr.rel (0) target = $region5
  $region4: #{tpu_custom_call.1} parent=0 // pred_region
    _
  $region5: #{tpu_custom_call.1} parent=0 // pred_fallthru
    _
  // Predicated region
  $region6: #{tpu_custom_call.1} parent=0 // pred_check
    _
  $region7: #{tpu_custom_call.1} parent=0 // pred_check_branch
    %11 = sbr.rel (0) target = $region9
  $region8: #{tpu_custom_call.1} parent=0 // pred_region
    _
  $region9: #{tpu_custom_call.1} parent=0 // pred_fallthru
    _
  // Predicated region
  $region10: #{tpu_custom_call.1} parent=0 // pred_check
    _
  $region11: #{tpu_custom_call.1} parent=0 // pred_check_branch
    %13 = sbr.rel (0) target = $region13
  $region12: #{tpu_custom_call.1} parent=0 // pred_region
    _
  $region13: #{tpu_custom_call.1} parent=0 // pred_fallthru
    _
  %v14 = vld [vmem:[%s0] sm:$0xff]
  %v15 = vld [vmem:[%s0 + $0x8] sm:$0xff]
  %v16 = vld [vmem:[%s0 + $0x10] sm:$0xff]
  %v17 = vld [vmem:[%s0 + $0x18] sm:$0xff]
  %v18 = vld [vmem:[%s0 + $0x20] sm:$0xff]
  %v19 = vld [vmem:[%s0 + $0x28] sm:$0xff]
  %v20 = vld [vmem:[%s0 + $0x30] sm:$0xff]
  %v21 = vld [vmem:[%s0 + $0x38] sm:$0xff]
  %v22 = vld [vmem:[%s1] sm:$0xff]
  %v23 = vld [vmem:[%s1 + $0x8] sm:$0xff]
  %v24 = vld [vmem:[%s1 + $0x10] sm:$0xff]
  %v25 = vld [vmem:[%s1 + $0x18] sm:$0xff]
  %vm26 = vcmask 261120
  %v28 = vsel %vm26, %v14, 0
  %v31 = vsel %vm26, %v15, 0
  %v34 = vsel %vm26, %v16, 0
  %v37 = vsel %vm26, %v17, 0
  %v40 = vsel %vm26, %v18, 0
  %v43 = vsel %vm26, %v19, 0
  %v46 = vsel %vm26, %v20, 0
  %v49 = vsel %vm26, %v21, 0
  %51 = vmatpush.msra.mxu0 0.0
  %52 = vmatpush.msra.mxu0 0.0
  %53 = vmatpush.msra.mxu0 0.0
  %54 = vmatpush.msra.mxu0 0.0
  %55 = vmatpush.msra.mxu0 0.0
  %56 = vmatpush.msra.mxu0 0.0
  %57 = vmatpush.msra.mxu0 0.0
  %58 = vmatpush.msra.mxu0 0.0
  %59 = vmatpush.msra.mxu0 0.0
  %60 = vmatpush.msra.mxu0 0.0
  %61 = vmatpush.msra.mxu0 0.0
  %62 = vmatpush.msra.mxu0 0.0
  %63 = vmatpush.msra.mxu0 %v25
  %64 = vmatpush.msra.mxu0 %v24
  %65 = vmatpush.msra.mxu0 %v23
  %66 = vmatpush.msra.mxu0 %v22
  %67 = vmatmul.f32.gmra.mxu0 %v28
  %v68 = vpop.f32.mrf.mxu0
  %v69 = vadd.f32 0.0, %v68
  %70 = vmatmul.f32.gmra.mxu0 %v31
  %v71 = vpop.f32.mrf.mxu0
  %v72 = vadd.f32 0.0, %v71
  %73 = vmatmul.f32.gmra.mxu0 %v34
  %v74 = vpop.f32.mrf.mxu0
  %v75 = vadd.f32 0.0, %v74
  %76 = vmatmul.f32.gmra.mxu0 %v37
  %v77 = vpop.f32.mrf.mxu0
  %v78 = vadd.f32 0.0, %v77
  %79 = vmatmul.f32.gmra.mxu0 %v40
  %v80 = vpop.f32.mrf.mxu0
  %v81 = vadd.f32 0.0, %v80
  %82 = vmatmul.f32.gmra.mxu0 %v43
  %v83 = vpop.f32.mrf.mxu0
  %v84 = vadd.f32 0.0, %v83
  %85 = vmatmul.f32.gmra.mxu0 %v46
  %v86 = vpop.f32.mrf.mxu0
  %v87 = vadd.f32 0.0, %v86
  %88 = vmatmul.f32.gmra.mxu0 %v49
  %v89 = vpop.f32.mrf.mxu0
  %v90 = vadd.f32 0.0, %v89
  %91 = vdwg.mxu0
  %v92 = vmul.f32 %v69, 8.0
  %v93 = vmul.f32 %v72, 8.0
  %v94 = vmul.f32 %v75, 8.0
  %v95 = vmul.f32 %v78, 8.0
  %v96 = vmul.f32 %v81, 8.0
  %v97 = vmul.f32 %v84, 8.0
  %v98 = vmul.f32 %v87, 8.0
  %v99 = vmul.f32 %v90, 8.0
  %v100 = vld [vmem:[%s2] sm:$0xf]
  %vm101 = vcmask 31744
  %v103 = vsel %vm101, %v92, 0
  %v106 = vsel %vm101, %v93, 0
  %v109 = vsel %vm101, %v94, 0
  %v112 = vsel %vm101, %v95, 0
  %v115 = vsel %vm101, %v96, 0
  %v118 = vsel %vm101, %v97, 0
  %v121 = vsel %vm101, %v98, 0
  %v124 = vsel %vm101, %v99, 0
  %vm126 = vcmask 1043456
  %v128 = vsel %vm126, %v100, 0
  %130 = vmatpush.msra.mxu0 0.0
  %131 = vmatpush.msra.mxu0 0.0
  %132 = vmatpush.msra.mxu0 0.0
  %133 = vmatpush.msra.mxu0 0.0
  %134 = vmatpush.msra.mxu0 0.0
  %135 = vmatpush.msra.mxu0 0.0
  %136 = vmatpush.msra.mxu0 0.0
  %137 = vmatpush.msra.mxu0 0.0
  %138 = vmatpush.msra.mxu0 0.0
  %139 = vmatpush.msra.mxu0 0.0
  %140 = vmatpush.msra.mxu0 0.0
  %141 = vmatpush.msra.mxu0 0.0
  %142 = vmatpush.msra.mxu0 0.0
  %143 = vmatpush.msra.mxu0 0.0
  %144 = vmatpush.msra.mxu0 0.0
  %145 = vmatpush.msra.mxu0 %v128
  %146 = vmatmul.f32.gmra.mxu0 %v103
  %v147 = vpop.f32.mrf.mxu0
  %v148 = vadd.f32 0.0, %v147
  %149 = vmatmul.f32.gmra.mxu0 %v106
  %v150 = vpop.f32.mrf.mxu0
  %v151 = vadd.f32 0.0, %v150
  %152 = vmatmul.f32.gmra.mxu0 %v109
  %v153 = vpop.f32.mrf.mxu0
  %v154 = vadd.f32 0.0, %v153
  %155 = vmatmul.f32.gmra.mxu0 %v112
  %v156 = vpop.f32.mrf.mxu0
  %v157 = vadd.f32 0.0, %v156
  %158 = vmatmul.f32.gmra.mxu0 %v115
  %v159 = vpop.f32.mrf.mxu0
  %v160 = vadd.f32 0.0, %v159
  %161 = vmatmul.f32.gmra.mxu0 %v118
  %v162 = vpop.f32.mrf.mxu0
  %v163 = vadd.f32 0.0, %v162
  %164 = vmatmul.f32.gmra.mxu0 %v121
  %v165 = vpop.f32.mrf.mxu0
  %v166 = vadd.f32 0.0, %v165
  %167 = vmatmul.f32.gmra.mxu0 %v124
  %v168 = vpop.f32.mrf.mxu0
  %v169 = vadd.f32 0.0, %v168
  %170 = vdwg.mxu0
  %171 = vst.msk [vmem:[%s3] sm:$0xff] %vm26, %v148
  %172 = vst.msk [vmem:[%s3 + $0x8] sm:$0xff] %vm26, %v151
  %173 = vst.msk [vmem:[%s3 + $0x10] sm:$0xff] %vm26, %v154
  %174 = vst.msk [vmem:[%s3 + $0x18] sm:$0xff] %vm26, %v157
  %175 = vst.msk [vmem:[%s3 + $0x20] sm:$0xff] %vm26, %v160
  %176 = vst.msk [vmem:[%s3 + $0x28] sm:$0xff] %vm26, %v163
  %177 = vst.msk [vmem:[%s3 + $0x30] sm:$0xff] %vm26, %v166
  %178 = vst.msk [vmem:[%s3 + $0x38] sm:$0xff] %vm26, %v169
  // Predicated region
  $region14: #{tpu_custom_call.1} parent=0 // pred_check
    _
  $region15: #{tpu_custom_call.1} parent=0 // pred_check_branch
    %180 = sbr.rel (0) target = $region17
  $region16: #{tpu_custom_call.1} parent=0 // pred_region
    _
  $region17: #{tpu_custom_call.1} parent=0 // pred_fallthru
    _
  // Predicated region
  $region18: #{tpu_custom_call.1} parent=0 // pred_check
    _
  $region19: #{tpu_custom_call.1} parent=0 // pred_check_branch
    %182 = sbr.rel (0) target = $region21
  $region20: #{tpu_custom_call.1} parent=0 // pred_region
    _
  $region21: #{tpu_custom_call.1} parent=0 // pred_fallthru
    _

</llo_original>
